<compile_context>
chip_gen: v7x
topology: tpu7x:2x2x1
jax: 0.10.0
libtpu: 0.0.40
codegen_flags: <defaults>
</compile_context>

<pallas_src>
import functools

import numpy as np
import jax
import jax.numpy as jnp
from jax.experimental import pallas as pl
from jax.experimental.pallas import tpu as pltpu


_TILE_M = 256          # conservative (v7x 64 MiB VMEM safe); sweep up on v5e/v6e
_TILE_N = 512
_TILE_K = 512
_VMEM_LIMIT = 32 * 1024 * 1024
_NEG_INF = -1e9


def _pick_tile(dim, target, align):
    """Largest tile <= target that divides `dim` and is a multiple of `align`;
    falls back to the full dimension (full-extent blocks are always legal)."""
    if dim <= target:
        return dim
    t = (target // align) * align
    while t >= align:
        if dim % t == 0:
            return t
        t -= align
    return dim


def _mosaic_params(sem):
    return pltpu.CompilerParams(dimension_semantics=sem,
                                vmem_limit_bytes=_VMEM_LIMIT)


# ----------------------------------------------------------------------------
# Tiled linear (bias / ReLU epilogue), K-axis accumulation in VMEM scratch
# ----------------------------------------------------------------------------

def _matmul_body(x_ref, w_ref, b_ref, o_ref, acc_ref, *, relu):
    k = pl.program_id(2)

    @pl.when(k == 0)
    def _():
        acc_ref[...] = jnp.zeros_like(acc_ref)

    acc_ref[...] += jnp.dot(x_ref[...].astype(jnp.bfloat16),
                            w_ref[...].astype(jnp.bfloat16),
                            preferred_element_type=jnp.float32)

    @pl.when(k == pl.num_programs(2) - 1)
    def _():
        y = acc_ref[...]
        if b_ref is not None:
            y = y + b_ref[...]
        if relu:
            y = jnp.maximum(y, 0.0)
        o_ref[...] = y


def _matmul_bias_kernel(x_ref, w_ref, b_ref, o_ref, acc_ref, *, relu):
    _matmul_body(x_ref, w_ref, b_ref, o_ref, acc_ref, relu=relu)


def _matmul_nobias_kernel(x_ref, w_ref, o_ref, acc_ref, *, relu):
    _matmul_body(x_ref, w_ref, None, o_ref, acc_ref, relu=relu)


def linear(x2d, w, b=None, relu=False):
    """y = x2d @ w (+ b) [+ ReLU].  x2d: [M, K] f32, w: [K, N] (bf16 ok)."""
    M, K = x2d.shape
    N = w.shape[1]
    tm = _pick_tile(M, _TILE_M, 8)
    tn = _pick_tile(N, _TILE_N, 128)
    tk = _pick_tile(K, _TILE_K, 128)
    grid = (M // tm, N // tn, K // tk)
    in_specs = [pl.BlockSpec((tm, tk), lambda i, j, k: (i, k)),
                pl.BlockSpec((tk, tn), lambda i, j, k: (k, j))]
    args = [x2d, w]
    if b is not None:
        in_specs.append(pl.BlockSpec((1, tn), lambda i, j, k: (0, j)))
        args.append(jnp.reshape(b, (1, N)))
        kernel = functools.partial(_matmul_bias_kernel, relu=relu)
    else:
        kernel = functools.partial(_matmul_nobias_kernel, relu=relu)
    return pl.pallas_call(
        kernel,
        out_shape=jax.ShapeDtypeStruct((M, N), jnp.float32),
        grid=grid,
        in_specs=in_specs,
        out_specs=pl.BlockSpec((tm, tn), lambda i, j, k: (i, j)),
        scratch_shapes=[pltpu.VMEM((tm, tn), jnp.float32)],
        compiler_params=_mosaic_params(("parallel", "parallel", "arbitrary")),
    )(*args)


# ----------------------------------------------------------------------------
# Fused linear + residual-add + LayerNorm (N kept whole so LN sees full rows)
# ----------------------------------------------------------------------------

def _matmul_res_ln_body(x_ref, w_ref, b_ref, res_ref, g_ref, bb_ref, o_ref,
                        acc_ref, *, eps):
    k = pl.program_id(1)

    @pl.when(k == 0)
    def _():
        acc_ref[...] = jnp.zeros_like(acc_ref)

    acc_ref[...] += jnp.dot(x_ref[...].astype(jnp.bfloat16),
                            w_ref[...].astype(jnp.bfloat16),
                            preferred_element_type=jnp.float32)

    @pl.when(k == pl.num_programs(1) - 1)
    def _():
        y = acc_ref[...]
        if b_ref is not None:
            y = y + b_ref[...]
        y = y + res_ref[...]
        mu = jnp.mean(y, axis=-1, keepdims=True)
        var = jnp.mean((y - mu) ** 2, axis=-1, keepdims=True)
        o_ref[...] = (y - mu) * jax.lax.rsqrt(var + eps) * g_ref[...] + bb_ref[...]


def _matmul_res_ln_bias_kernel(x_ref, w_ref, b_ref, res_ref, g_ref, bb_ref,
                               o_ref, acc_ref, *, eps):
    _matmul_res_ln_body(x_ref, w_ref, b_ref, res_ref, g_ref, bb_ref, o_ref,
                        acc_ref, eps=eps)


def _matmul_res_ln_nobias_kernel(x_ref, w_ref, res_ref, g_ref, bb_ref,
                                 o_ref, acc_ref, *, eps):
    _matmul_res_ln_body(x_ref, w_ref, None, res_ref, g_ref, bb_ref, o_ref,
                        acc_ref, eps=eps)


def linear_residual_ln(x2d, w, b, residual2d, gamma, beta, eps=1e-6):
    """LayerNorm(residual2d + x2d @ w (+ b))."""
    M, K = x2d.shape
    N = w.shape[1]
    tm = _pick_tile(M, _TILE_M, 8)
    tk = _pick_tile(K, _TILE_K, 128)
    grid = (M // tm, K // tk)
    in_specs = [pl.BlockSpec((tm, tk), lambda i, k: (i, k)),
                pl.BlockSpec((tk, N), lambda i, k: (k, 0))]
    args = [x2d, w]
    if b is not None:
        in_specs.append(pl.BlockSpec((1, N), lambda i, k: (0, 0)))
        args.append(jnp.reshape(b, (1, N)))
        kernel = functools.partial(_matmul_res_ln_bias_kernel, eps=eps)
    else:
        kernel = functools.partial(_matmul_res_ln_nobias_kernel, eps=eps)
    in_specs += [pl.BlockSpec((tm, N), lambda i, k: (i, 0)),
                 pl.BlockSpec((1, N), lambda i, k: (0, 0)),
                 pl.BlockSpec((1, N), lambda i, k: (0, 0))]
    args += [residual2d, jnp.reshape(gamma, (1, N)), jnp.reshape(beta, (1, N))]
    return pl.pallas_call(
        kernel,
        out_shape=jax.ShapeDtypeStruct((M, N), jnp.float32),
        grid=grid,
        in_specs=in_specs,
        out_specs=pl.BlockSpec((tm, N), lambda i, k: (i, 0)),
        scratch_shapes=[pltpu.VMEM((tm, N), jnp.float32)],
        compiler_params=_mosaic_params(("parallel", "arbitrary")),
    )(*args)


# ----------------------------------------------------------------------------
# Standalone LayerNorm (final encoder / decoder norms)
# ----------------------------------------------------------------------------

def _layer_norm_kernel(x_ref, g_ref, b_ref, o_ref, *, eps):
    x = x_ref[...]
    mu = jnp.mean(x, axis=-1, keepdims=True)
    var = jnp.mean((x - mu) ** 2, axis=-1, keepdims=True)
    o_ref[...] = (x - mu) * jax.lax.rsqrt(var + eps) * g_ref[...] + b_ref[...]


def layer_norm(x2d, gamma, beta, eps=1e-6):
    M, D = x2d.shape
    tm = _pick_tile(M, _TILE_M, 8)
    return pl.pallas_call(
        functools.partial(_layer_norm_kernel, eps=eps),
        out_shape=jax.ShapeDtypeStruct((M, D), jnp.float32),
        grid=(M // tm,),
        in_specs=[pl.BlockSpec((tm, D), lambda i: (i, 0)),
                  pl.BlockSpec((1, D), lambda i: (0, 0)),
                  pl.BlockSpec((1, D), lambda i: (0, 0))],
        out_specs=pl.BlockSpec((tm, D), lambda i: (i, 0)),
        compiler_params=_mosaic_params(("parallel",)),
    )(x2d, jnp.reshape(gamma, (1, D)), jnp.reshape(beta, (1, D)))


# ----------------------------------------------------------------------------
# Attention: per-batch lane-dense slabs, in-kernel pad + causal masking
# ----------------------------------------------------------------------------

def _attention_kernel(q_ref, kv_ref, bias_ref, o_ref, *, n_head, d_k, d_v, causal):
    q = q_ref[0]            # (Lq, H*dk) f32 ; W_Q was pre-scaled by dk**-0.5
    kv = kv_ref[0]          # (Lk, H*dk + H*dv) f32
    key_bias = bias_ref[0]  # (1, Lk) additive 0 / -1e9 pad bias
    Lq = q.shape[0]
    Lk = kv.shape[0]
    if causal:
        row = jax.lax.broadcasted_iota(jnp.int32, (Lq, Lk), 0)
        col = jax.lax.broadcasted_iota(jnp.int32, (Lq, Lk), 1)
        causal_bias = jnp.where(col <= row, 0.0, _NEG_INF)
    v_off = n_head * d_k
    outs = []
    for h in range(n_head):  # static unroll; all heads reuse the resident slabs
        qh = q[:, h * d_k:(h + 1) * d_k]
        kh = kv[:, h * d_k:(h + 1) * d_k]
        vh = kv[:, v_off + h * d_v: v_off + (h + 1) * d_v]
        s = jax.lax.dot_general(qh.astype(jnp.bfloat16), kh.astype(jnp.bfloat16),
                                (((1,), (1,)), ((), ())),
                                preferred_element_type=jnp.float32)
        s = s + key_bias
        if causal:
            s = s + causal_bias
        s = s - jnp.max(s, axis=-1, keepdims=True)
        e = jnp.exp(s)
        p = e * pl.reciprocal(jnp.sum(e, axis=-1, keepdims=True), approx=True)
        outs.append(jnp.dot(p.astype(jnp.bfloat16), vh.astype(jnp.bfloat16),
                            preferred_element_type=jnp.float32))
    o_ref[0] = jnp.concatenate(outs, axis=-1)  # one lane-dense (Lq, H*dv) store


def attention(q, kv, key_bias, *, n_head, d_k, d_v, causal):
    """q: [B, Lq, H*dk], kv: [B, Lk, H*(dk+dv)], key_bias: [B, 1, Lk] additive."""
    B, Lq, _ = q.shape
    Lk = kv.shape[1]
    dq = n_head * d_k
    dkv = n_head * (d_k + d_v)
    dv_all = n_head * d_v
    return pl.pallas_call(
        functools.partial(_attention_kernel, n_head=n_head, d_k=d_k, d_v=d_v,
                          causal=causal),
        out_shape=jax.ShapeDtypeStruct((B, Lq, dv_all), jnp.float32),
        grid=(B,),
        in_specs=[pl.BlockSpec((1, Lq, dq), lambda b: (b, 0, 0)),
                  pl.BlockSpec((1, Lk, dkv), lambda b: (b, 0, 0)),
                  pl.BlockSpec((1, 1, Lk), lambda b: (b, 0, 0))],
        out_specs=pl.BlockSpec((1, Lq, dv_all), lambda b: (b, 0, 0)),
        compiler_params=_mosaic_params(("parallel",)),
    )(q, kv, key_bias)


# ----------------------------------------------------------------------------
# Tied output projection: logits = (x @ embed_w.T) * scale, no transpose copy
# ----------------------------------------------------------------------------

def _tied_proj_kernel(x_ref, w_ref, o_ref, acc_ref, *, scale):
    k = pl.program_id(2)

    @pl.when(k == 0)
    def _():
        acc_ref[...] = jnp.zeros_like(acc_ref)

    acc_ref[...] += jax.lax.dot_general(
        x_ref[...].astype(jnp.bfloat16), w_ref[...].astype(jnp.bfloat16),
        (((1,), (1,)), ((), ())), preferred_element_type=jnp.float32)

    @pl.when(k == pl.num_programs(2) - 1)
    def _():
        o_ref[...] = acc_ref[...] * scale


def tied_output_projection(x2d, embed_w, scale):
    M, K = x2d.shape
    V = embed_w.shape[0]
    tm = _pick_tile(M, _TILE_M, 8)
    tv = _pick_tile(V, _TILE_N, 128)
    tk = _pick_tile(K, _TILE_K, 128)
    grid = (M // tm, V // tv, K // tk)
    return pl.pallas_call(
        functools.partial(_tied_proj_kernel, scale=scale),
        out_shape=jax.ShapeDtypeStruct((M, V), jnp.float32),
        grid=grid,
        in_specs=[pl.BlockSpec((tm, tk), lambda i, j, k: (i, k)),
                  pl.BlockSpec((tv, tk), lambda i, j, k: (j, k))],
        out_specs=pl.BlockSpec((tm, tv), lambda i, j, k: (i, j)),
        scratch_shapes=[pltpu.VMEM((tm, tv), jnp.float32)],
        compiler_params=_mosaic_params(("parallel", "parallel", "arbitrary")),
    )(x2d, embed_w)


# ----------------------------------------------------------------------------
# Model glue (plain JAX around the Pallas kernels)
# ----------------------------------------------------------------------------

def multi_head_attention(p, q_in, kv_in, key_bias, causal, cfg):
    H, d_k, d_v = cfg['n_head'], cfg['d_k'], cfg['d_v']
    B, Lq, D = q_in.shape
    Lk = kv_in.shape[1]
    residual2d = q_in.reshape(B * Lq, D)
    if 'w_qkv' in p:           # self-attention: one fused QKV matmul
        qkv = linear(residual2d, p['w_qkv']).reshape(B, Lq, H * (2 * d_k + d_v))
        q = qkv[:, :, :H * d_k]
        kv = qkv[:, :, H * d_k:]
    else:                      # cross-attention: Q from decoder, fused KV from encoder
        q = linear(residual2d, p['w_q']).reshape(B, Lq, H * d_k)
        kv = linear(kv_in.reshape(B * Lk, D), p['w_kv']).reshape(B, Lk, H * (d_k + d_v))
    ctx = attention(q, kv, key_bias, n_head=H, d_k=d_k, d_v=d_v, causal=causal)
    out2d = linear_residual_ln(ctx.reshape(B * Lq, H * d_v), p['w_fc'], None,
                               residual2d, p['ln_g'], p['ln_b'])
    return out2d.reshape(B, Lq, D)


def positionwise_ffn(p, x):
    B, L, D = x.shape
    x2d = x.reshape(B * L, D)
    h = linear(x2d, p['w1'], p['b1'], relu=True)
    out2d = linear_residual_ln(h, p['w2'], p['b2'], x2d, p['ln_g'], p['ln_b'])
    return out2d.reshape(B, L, D)


def transformer_forward(params, in_seq, target_seq, cfg):
    """in_seq: [B, L_in] int32; target_seq: [B, L_t] int32 -> [B*L_t, vocab] f32."""
    B, L_in = in_seq.shape
    L_t = target_seq.shape[1]
    D = cfg['d_model']
    embed_w = params['embed']
    pos_table = params['pos_table']

    # Compact additive key-pad biases (0 = valid, -1e9 = pad); the causal part of
    # the decoder self-attention mask is built in-kernel from a 2-D iota.
    enc_key_bias = jnp.where(in_seq != cfg['in_pad_idx'], 0.0, _NEG_INF
                             ).astype(jnp.float32)[:, None, :]    # [B, 1, L_in]
    dec_key_bias = jnp.where(target_seq != cfg['out_pad_idx'], 0.0, _NEG_INF
                             ).astype(jnp.float32)[:, None, :]    # [B, 1, L_t]

    # ---- encoder ----
    x = jnp.take(embed_w, in_seq, axis=0) + pos_table[:, :L_in]
    for lp in params['enc_layers']:
        x = multi_head_attention(lp['slf'], x, x, enc_key_bias, False, cfg)
        x = positionwise_ffn(lp['ffn'], x)
    x = layer_norm(x.reshape(B * L_in, D), params['enc_ln_g'],
                   params['enc_ln_b']).reshape(B, L_in, D)
    enc_out = x

    # ---- decoder ----
    y = jnp.take(embed_w, target_seq, axis=0) + pos_table[:, :L_t]
    for lp in params['dec_layers']:
        y = multi_head_attention(lp['slf'], y, y, dec_key_bias, True, cfg)
        y = multi_head_attention(lp['enc'], y, enc_out, enc_key_bias, False, cfg)
        y = positionwise_ffn(lp['ffn'], y)
    y = layer_norm(y.reshape(B * L_t, D), params['dec_ln_g'],
                   params['dec_ln_b']).reshape(B, L_t, D)

    # ---- tied output projection (weight = embed, scale d_model**-0.5 fused) ----
    logits = tied_output_projection(y.reshape(B * L_t, D), embed_w,
                                    scale=float(D) ** -0.5)
    return logits  # [B * L_t, vocab]


# ----------------------------------------------------------------------------
# Deterministic parameter initialization
# ----------------------------------------------------------------------------

def _sinusoid_table(n_position, d_hid):
    def angle(pos):
        return [pos / np.power(10000, 2 * (i // 2) / d_hid) for i in range(d_hid)]
    t = np.array([angle(p) for p in range(n_position)], dtype=np.float64)
    t[:, 0::2] = np.sin(t[:, 0::2])
    t[:, 1::2] = np.cos(t[:, 1::2])
    return jnp.asarray(t[None].astype(np.float32))


def init_params(key, cfg):
    D, H, d_k, d_v, d_inner = (cfg['d_model'], cfg['n_head'], cfg['d_k'],
                               cfg['d_v'], cfg['d_inner'])
    keys = iter(jax.random.split(key, 512))

    def xavier(shape):
        fan_in, fan_out = shape
        bound = float(np.sqrt(6.0 / (fan_in + fan_out)))
        return jax.random.uniform(next(keys), shape, jnp.float32, -bound, bound)

    def small_uniform(shape, fan_in):
        bound = 1.0 / float(np.sqrt(fan_in))
        return jax.random.uniform(next(keys), shape, jnp.float32, -bound, bound)

    def mha_params(cross):
        # 1/sqrt(d_k) folded into W_Q once here (no runtime scaling).
        w_q = xavier((D, H * d_k)) * (float(d_k) ** -0.5)
        w_k = xavier((D, H * d_k))
        w_v = xavier((D, H * d_v))
        p = dict(
            w_fc=xavier((H * d_v, D)).astype(jnp.bfloat16),
            ln_g=jnp.ones((D,), jnp.float32),
            ln_b=jnp.zeros((D,), jnp.float32),
        )
        if cross:
            p['w_q'] = w_q.astype(jnp.bfloat16)
            p['w_kv'] = jnp.concatenate([w_k, w_v], axis=1).astype(jnp.bfloat16)
        else:
            p['w_qkv'] = jnp.concatenate([w_q, w_k, w_v], axis=1).astype(jnp.bfloat16)
        return p

    def ffn_params():
        return dict(
            w1=xavier((D, d_inner)).astype(jnp.bfloat16),
            b1=small_uniform((d_inner,), D),
            w2=xavier((d_inner, D)).astype(jnp.bfloat16),
            b2=small_uniform((D,), d_inner),
            ln_g=jnp.ones((D,), jnp.float32),
            ln_b=jnp.zeros((D,), jnp.float32),
        )

    params = dict(
        embed=xavier((cfg['vocab'], D)),   # f32: embedding lookup + tied projection
        pos_table=_sinusoid_table(cfg['n_position'], D),
        enc_layers=[dict(slf=mha_params(False), ffn=ffn_params())
                    for _ in range(cfg['n_layers'])],
        dec_layers=[dict(slf=mha_params(False), enc=mha_params(True),
                         ffn=ffn_params())
                    for _ in range(cfg['n_layers'])],
        enc_ln_g=jnp.ones((D,), jnp.float32),
        enc_ln_b=jnp.zeros((D,), jnp.float32),
        dec_ln_g=jnp.ones((D,), jnp.float32),
        dec_ln_b=jnp.zeros((D,), jnp.float32),
    )
    return params


# ----------------------------------------------------------------------------
# Main
# ----------------------------------------------------------------------------

if __name__ == "__main__":
    cfg = dict(
        vocab=40,
        d_model=32,
        d_inner=64,
        n_layers=2,
        n_head=4,
        d_k=8,
        d_v=8,
        n_position=32,
        in_pad_idx=0,
        out_pad_idx=0,
    )
    B, L_in, L_t = 2, 8, 8

    root = jax.random.PRNGKey(0)
    k_params, k_in, k_tgt = jax.random.split(root, 3)

    params = init_params(k_params, cfg)
    in_seq = jax.random.randint(k_in, (B, L_in), 0, cfg['vocab'], dtype=jnp.int32)
    target_seq = jax.random.randint(k_tgt, (B, L_t), 0, cfg['vocab'], dtype=jnp.int32)

    logits = transformer_forward(params, in_seq, target_seq, cfg)
    logits = jax.block_until_ready(logits)

    assert logits.shape == (B * L_t, cfg['vocab']), logits.shape
    assert jnp.all(jnp.isfinite(logits))
    print("KERNEL_OK")
</pallas_src>

<mosaic_0001>
module attributes {stable_mosaic.version = 11 : i64} {
  func.func @_matmul_nobias_kernel(%arg0: i32, %arg1: i32, %arg2: i32, %arg3: memref<16x32xf32, #tpu.memory_space<vmem>>, %arg4: memref<32x96xbf16, #tpu.memory_space<vmem>>, %arg5: memref<16x96xf32, #tpu.memory_space<vmem>>, %arg6: memref<16x96xf32, #tpu.memory_space<vmem>>) attributes {dimension_semantics = [#tpu.dimension_semantics<parallel>, #tpu.dimension_semantics<parallel>, #tpu.dimension_semantics<arbitrary>], iteration_bounds = array<i64: 1, 1, 1>, scalar_prefetch = 0 : i64, scratch_operands = 1 : i64, tpu.core_type = #tpu.core_type<tc>, window_params = [{transform_indices = @transform_0, window_bounds = array<i64: 16, 32>}, {transform_indices = @transform_1, window_bounds = array<i64: 32, 96>}, {transform_indices = @transform_2, window_bounds = array<i64: 16, 96>}]} {
    %c0_i32 = arith.constant 0 : i32
    %0 = arith.cmpi eq, %arg2, %c0_i32 : i32
    %1 = arith.extui %0 : i1 to i32
    %c0_i32_0 = arith.constant 0 : i32
    %2 = arith.cmpi ne, %1, %c0_i32_0 : i32
    scf.if %2 {
      %cst_10 = arith.constant 0.000000e+00 : f32
      %13 = vector.broadcast %cst_10 : f32 to vector<16x96xf32>
      %c0_11 = arith.constant 0 : index
      %c0_12 = arith.constant 0 : index
      %14 = vector.load %arg6[%c0_11, %c0_12] : memref<16x96xf32, #tpu.memory_space<vmem>>, vector<16x96xf32>
      tpu.vector_store %arg6[%c0_11, %c0_12], %13 {strides = array<i32>} : memref<16x96xf32, #tpu.memory_space<vmem>>, vector<16x96xf32>,
    } else {
    }
    %c0 = arith.constant 0 : index
    %c0_1 = arith.constant 0 : index
    %3 = vector.load %arg6[%c0, %c0_1] : memref<16x96xf32, #tpu.memory_space<vmem>>, vector<16x96xf32>
    %c0_2 = arith.constant 0 : index
    %c0_3 = arith.constant 0 : index
    %4 = vector.load %arg3[%c0_2, %c0_3] : memref<16x32xf32, #tpu.memory_space<vmem>>, vector<16x32xf32>
    %5 = arith.truncf %4 : vector<16x32xf32> to vector<16x32xbf16>
    %c0_4 = arith.constant 0 : index
    %c0_5 = arith.constant 0 : index
    %6 = vector.load %arg4[%c0_4, %c0_5] : memref<32x96xbf16, #tpu.memory_space<vmem>>, vector<32x96xbf16>
    %cst = arith.constant dense<0.000000e+00> : vector<16x96xf32>
    %7 = tpu.matmul %5, %6, %cst {dimension_numbers = #tpu.dot_dimension_numbers<[1], [0], [0], [1], [0, 0, 1, 1], [], []>} : vector<16x32xbf16>, vector<32x96xbf16>, vector<16x96xf32> -> vector<16x96xf32>
    %8 = arith.addf %3, %7 : vector<16x96xf32>
    %c0_6 = arith.constant 0 : index
    %c0_7 = arith.constant 0 : index
    %9 = vector.load %arg6[%c0_6, %c0_7] : memref<16x96xf32, #tpu.memory_space<vmem>>, vector<16x96xf32>
    tpu.vector_store %arg6[%c0_6, %c0_7], %8 {strides = array<i32>} : memref<16x96xf32, #tpu.memory_space<vmem>>, vector<16x96xf32>,
    %c0_i32_8 = arith.constant 0 : i32
    %10 = arith.cmpi eq, %arg2, %c0_i32_8 : i32
    %11 = arith.extui %10 : i1 to i32
    %c0_i32_9 = arith.constant 0 : i32
    %12 = arith.cmpi ne, %11, %c0_i32_9 : i32
    scf.if %12 {
      %c0_10 = arith.constant 0 : index
      %c0_11 = arith.constant 0 : index
      %13 = vector.load %arg6[%c0_10, %c0_11] : memref<16x96xf32, #tpu.memory_space<vmem>>, vector<16x96xf32>
      %c0_12 = arith.constant 0 : index
      %c0_13 = arith.constant 0 : index
      %14 = vector.load %arg5[%c0_12, %c0_13] : memref<16x96xf32, #tpu.memory_space<vmem>>, vector<16x96xf32>
      tpu.vector_store %arg5[%c0_12, %c0_13], %13 {strides = array<i32>} : memref<16x96xf32, #tpu.memory_space<vmem>>, vector<16x96xf32>,
    } else {
    }
    return
  }
  func.func @transform_0(%arg0: i32, %arg1: i32, %arg2: i32) -> (i32, i32) {
    %c0_i32 = arith.constant 0 : i32
    return %arg0, %arg2 : i32, i32
  }
  func.func @transform_1(%arg0: i32, %arg1: i32, %arg2: i32) -> (i32, i32) {
    %c0_i32 = arith.constant 0 : i32
    return %arg2, %arg1 : i32, i32
  }
  func.func @transform_2(%arg0: i32, %arg1: i32, %arg2: i32) -> (i32, i32) {
    %c0_i32 = arith.constant 0 : i32
    return %arg0, %arg1 : i32, i32
  }
}

</mosaic_0001>

<llo_original>
// kernel: tpu_custom_call.1
$region0: #{tpu_custom_call.1}
  #allocation0 [shape = 'u32[]', space=smem, size = 0x4, offset = 0x4, fixed_abs, tag = 'smem constant byte address 0x4 - core index']
  #allocation1 [shape = 'u32[144,128]{1,0:T(1,128)}', space=vmem, size = 0x12000, scoped, tag = 'internal scratch']
  #allocation2 [shape = 'f32[16,96]{1,0:T(8,128)}', space=vmem, size = 0x2000, scoped, tag = 'scratch operand']
  %s0 = inlined_call_operand.hbm [shape: f32[16,32], index: 0, kind: input, shape index: {}]
  %s1 = inlined_call_operand.hbm [shape: bf16[32,96], index: 1, kind: input, shape index: {}]
  %s2 = inlined_call_operand.hbm [shape: f32[16,96], index: 2, kind: output, shape index: {}]
  %s3 = sld [smem:[#allocation0]]
  $region34: #{tpu_custom_call.1} parent=0
    _
  %s5 = ssub.s32 1, %s3
  %s6 = scalar_select 0, %s5, %s3
  $region1: #{tpu_custom_call.1} parent=0
    #allocation3 [shape = 'u8[8192]{0}', space=vmem, size = 0x2000, scoped, tag = 'input window, operand 0, single buffered']
    #allocation4 [shape = 's32[1]{0}', space=sflag, size = 0x4, scoped, tag = 'scoped memory for tpu_custom_call.1']
    #allocation5 [shape = 's32[1]{0}', space=sflag, size = 0x4, scoped, tag = 'scoped memory for tpu_custom_call.1']
    #allocation6 [shape = 'u8[8192]{0}', space=vmem, size = 0x2000, scoped, tag = 'input window, operand 1, single buffered']
    #allocation7 [shape = 's32[1]{0}', space=sflag, size = 0x4, scoped, tag = 'scoped memory for tpu_custom_call.1']
    #allocation8 [shape = 'u8[8192]{0}', space=vmem, size = 0x2000, scoped, tag = 'output window, operand 0, single buffered']
    %7 = vsyncpa [#allocation4], 0
    %8 = vsyncpa [#allocation7], 0
    %9 = vsyncpa [#allocation5], 0
    // Predicated region
    $region2: #{tpu_custom_call.1} parent=1 // pred_check
      _
    $region3: #{tpu_custom_call.1} parent=1 // pred_check_branch
      %11 = sbr.rel (0) target = $region5
    $region4: #{tpu_custom_call.1} parent=1 // pred_region
      %s13 = ssub.s32 256, 256
      %14 = vsyncadd [#allocation4], %s13
      %s15 = sshll.u32 [#allocation3], 4
      %s16 = int_to_ptr.vmem [resolvable:$true] %s15
      %21 = dma.hbm_to_vmem [thread:$0]  %s0, 256, %s16, [#allocation4], 128, 128, 8
    $region5: #{tpu_custom_call.1} parent=1 // pred_fallthru
      _
    // Predicated region
    $region6: #{tpu_custom_call.1} parent=1 // pred_check
      _
    $region7: #{tpu_custom_call.1} parent=1 // pred_check_branch
      %23 = sbr.rel (0) target = $region9
    $region8: #{tpu_custom_call.1} parent=1 // pred_region
      %s25 = ssub.s32 256, 256
      %26 = vsyncadd [#allocation7], %s25
      %s27 = sshll.u32 [#allocation6], 4
      %s28 = int_to_ptr.vmem [resolvable:$true] %s27
      %33 = dma.hbm_to_vmem [thread:$0]  %s1, 256, %s28, [#allocation7], 64, 64, 4
    $region9: #{tpu_custom_call.1} parent=1 // pred_fallthru
      _
    // Predicated region
    $region10: #{tpu_custom_call.1} parent=1 // pred_check
      _
    $region11: #{tpu_custom_call.1} parent=1 // pred_check_branch
      %35 = sbr.rel (0) target = $region13
    $region12: #{tpu_custom_call.1} parent=1 // pred_region
      %36 = dma.done [#allocation4], 256
    $region13: #{tpu_custom_call.1} parent=1 // pred_fallthru
      _
    // Predicated region
    $region14: #{tpu_custom_call.1} parent=1 // pred_check
      _
    $region15: #{tpu_custom_call.1} parent=1 // pred_check_branch
      %38 = sbr.rel (0) target = $region17
    $region16: #{tpu_custom_call.1} parent=1 // pred_region
      %39 = dma.done [#allocation7], 256
    $region17: #{tpu_custom_call.1} parent=1 // pred_fallthru
      _
    %p41 = scmp.eq.s32.totalorder 0, 0
    // Predicated region
    $region18: #{tpu_custom_call.1} parent=1 // pred_check
      %p42 = pneg %p41
    $region19: #{tpu_custom_call.1} parent=1 // pred_check_branch
      %44 = sbr.rel (%p42) target = $region21
    $region20: #{tpu_custom_call.1} parent=1 // pred_region
      %vm45 = vcmask 785408
      %46 = vst.msk [vmem:[#allocation2] sm:$0xff] %vm45, 0.0
      %47 = vst.msk [vmem:[#allocation2 + $0x8] sm:$0xff] %vm45, 0.0
    $region21: #{tpu_custom_call.1} parent=1 // pred_fallthru
      _
    %v48 = vld [vmem:[#allocation2] sm:$0xff]
    %v49 = vld [vmem:[#allocation2 + $0x8] sm:$0xff]
    %v50 = vld [vmem:[#allocation3] sm:$0xff]
    %v51 = vld [vmem:[#allocation3 + $0x8] sm:$0xff]
    %v52 = vpack.c.bf16 %v51, %v50
    %v53 = vld [vmem:[#allocation6] sm:$0xf]
    %v54 = vld [vmem:[#allocation6 + $0x4] sm:$0xf]
    %v55 = vld [vmem:[#allocation6 + $0x8] sm:$0xf]
    %v56 = vld [vmem:[#allocation6 + $0xc] sm:$0xf]
    %v61 = vunpack.c.l.b16 %v53
    %v62 = vunpack.c.l.b16 %v54
    %v63 = vunpack.c.l.b16 %v55
    %v64 = vunpack.c.l.b16 %v56
    %v65 = vpack.c.b16 %v62, %v61
    %v66 = vpack.c.b16 %v64, %v63
    %vm69 = vcmask 261120
    %v71 = vsel %vm69, %v52, 0
    %73 = vmatprep.subr.bf16.mxu0 0
    %74 = vmatpush1.bf16.msra.mxu0 %v65
    %75 = vmatprep.subr.bf16.mxu0 0
    %76 = vmatpush1.bf16.msra.mxu0 %v66
    %77 = vmatprep.subr.bf16.mxu0 0
    %78 = vmatpush1.bf16.msra.mxu0 0
    %79 = vmatprep.subr.bf16.mxu0 0
    %80 = vmatpush1.bf16.msra.mxu0 0
    %81 = vmatprep.subr.bf16.mxu0 0
    %82 = vmatpush1.bf16.msra.mxu0 0
    %83 = vmatprep.subr.bf16.mxu0 0
    %84 = vmatpush1.bf16.msra.mxu0 0
    %85 = vmatprep.subr.bf16.mxu0 0
    %86 = vmatpush1.bf16.msra.mxu0 0
    %87 = vmatprep.subr.bf16.mxu0 0
    %88 = vmatpush1.bf16.msra.mxu0 0
    %89 = vmatprep.subr.bf16.mxu0 0
    %90 = vmatpush1.bf16.msra.mxu0 0
    %91 = vmatprep.subr.bf16.mxu0 0
    %92 = vmatpush1.bf16.msra.mxu0 0
    %93 = vmatprep.subr.bf16.mxu0 0
    %94 = vmatpush1.bf16.msra.mxu0 0
    %95 = vmatprep.subr.bf16.mxu0 0
    %96 = vmatpush1.bf16.msra.mxu0 0
    %97 = vmatprep.subr.bf16.mxu0 0
    %98 = vmatpush1.bf16.msra.mxu0 0
    %99 = vmatprep.subr.bf16.mxu0 0
    %100 = vmatpush1.bf16.msra.mxu0 0
    %101 = vmatprep.subr.bf16.mxu0 0
    %102 = vmatpush1.bf16.msra.mxu0 0
    %103 = vmatprep.subr.bf16.mxu0 0
    %104 = vmatpush1.bf16.msra.mxu0 0
    %105 = vmatprep.mubr.bf16.mxu0 0
    %106 = vmatmul.mubr.bf16.gmra.mrb[0].mxu0 %v71
    %v107 = vpop.f32.mrb[0].mxu0
    %v108 = vadd.f32 0.0, %v107
    %v109 = vpop.f32.mrb[0].mxu0
    %v110 = vpop.f32.mrb[0].mxu0
    %v111 = vadd.f32 0.0, %v110
    %v112 = vpop.f32.mrb[0].mxu0
    %113 = vdwg.mxu0
    %v114 = vadd.f32 %v48, %v108
    %v115 = vadd.f32 %v49, %v111
    %vm116 = vcmask 785408
    %117 = vst.msk [vmem:[#allocation2] sm:$0xff] %vm116, %v114
    %118 = vst.msk [vmem:[#allocation2 + $0x8] sm:$0xff] %vm116, %v115
    // Predicated region
    $region22: #{tpu_custom_call.1} parent=1 // pred_check
      %p119 = pneg %p41
    $region23: #{tpu_custom_call.1} parent=1 // pred_check_branch
      %121 = sbr.rel (%p119) target = $region25
    $region24: #{tpu_custom_call.1} parent=1 // pred_region
      %v122 = vld [vmem:[#allocation2] sm:$0xff]
      %v123 = vld [vmem:[#allocation2 + $0x8] sm:$0xff]
      %124 = vst.msk [vmem:[#allocation8] sm:$0xff] %vm116, %v122
      %125 = vst.msk [vmem:[#allocation8 + $0x8] sm:$0xff] %vm116, %v123
    $region25: #{tpu_custom_call.1} parent=1 // pred_fallthru
      _
    // Predicated region
    $region26: #{tpu_custom_call.1} parent=1 // pred_check
      _
    $region27: #{tpu_custom_call.1} parent=1 // pred_check_branch
      %127 = sbr.rel (0) target = $region29
    $region28: #{tpu_custom_call.1} parent=1 // pred_region
      %s129 = ssub.s32 256, 256
      %130 = vsyncadd [#allocation5], %s129
      %s131 = sshll.u32 [#allocation8], 4
      %s132 = int_to_ptr.vmem [resolvable:$true] %s131
      %137 = dma.vmem_to_hbm [thread:$0]  %s132, 256, %s2, [#allocation5], 128, 128, 8
    $region29: #{tpu_custom_call.1} parent=1 // pred_fallthru
      _
    // Predicated region
    $region30: #{tpu_custom_call.1} parent=1 // pred_check
      _
    $region31: #{tpu_custom_call.1} parent=1 // pred_check_branch
      %139 = sbr.rel (0) target = $region33
    $region32: #{tpu_custom_call.1} parent=1 // pred_region
      %140 = dma.done [#allocation5], 256
    $region33: #{tpu_custom_call.1} parent=1 // pred_fallthru
      _
    %141 = vsyncpa [#allocation4], 1
    %142 = vsyncpa [#allocation7], 1
    %143 = vsyncpa [#allocation5], 1

</llo_original>
